<compile_context>
chip_gen: v7x
topology: tpu7x:2x2x1
jax: 0.10.0
libtpu: 0.0.40
codegen_flags: <defaults>
</compile_context>

<pallas_src>
import functools

import numpy as np
import jax
import jax.numpy as jnp
from jax.experimental import pallas as pl
from jax.experimental.pallas import tpu as pltpu


# ----------------------------------------------------------------------------
# Deterministic mel filterbank (reimplementation of librosa.filters.mel,
# Slaney mel scale + Slaney norm), so no file loads / librosa import needed.
# ----------------------------------------------------------------------------
def _hz_to_mel(freqs):
    freqs = np.asarray(freqs, dtype=np.float64)
    f_min, f_sp = 0.0, 200.0 / 3.0
    mels = (freqs - f_min) / f_sp
    min_log_hz = 1000.0
    min_log_mel = (min_log_hz - f_min) / f_sp
    logstep = np.log(6.4) / 27.0
    log_t = freqs >= min_log_hz
    mels = np.where(log_t, min_log_mel + np.log(np.maximum(freqs, 1e-12) / min_log_hz) / logstep, mels)
    return mels


def _mel_to_hz(mels):
    mels = np.asarray(mels, dtype=np.float64)
    f_min, f_sp = 0.0, 200.0 / 3.0
    freqs = f_min + f_sp * mels
    min_log_hz = 1000.0
    min_log_mel = (min_log_hz - f_min) / f_sp
    logstep = np.log(6.4) / 27.0
    log_t = mels >= min_log_mel
    freqs = np.where(log_t, min_log_hz * np.exp(logstep * (mels - min_log_mel)), freqs)
    return freqs


def mel_filterbank(sr=8000, n_fft=256, n_mels=64, fmin=50.0, fmax=4000.0):
    n_freqs = 1 + n_fft // 2
    fftfreqs = np.linspace(0.0, sr / 2.0, n_freqs)
    mel_f = _mel_to_hz(np.linspace(_hz_to_mel(fmin), _hz_to_mel(fmax), n_mels + 2))
    fdiff = np.diff(mel_f)
    ramps = mel_f[:, None] - fftfreqs[None, :]
    lower = -ramps[:-2] / fdiff[:-1, None]
    upper = ramps[2:] / fdiff[1:, None]
    weights = np.maximum(0.0, np.minimum(lower, upper))
    enorm = 2.0 / (mel_f[2: n_mels + 2] - mel_f[:n_mels])
    weights *= enorm[:, None]
    # librosa returns (n_mels, n_freqs); the module stores the transpose (n_freqs, n_mels)
    return weights.T.astype(np.float32)


# ----------------------------------------------------------------------------
# Pallas kernel: mel projection + power_to_db (offset baked in as a constant)
# ----------------------------------------------------------------------------
def _logmel_kernel(spec_ref, mel_ref, out_ref, *, amin, offset, is_log):
    # spec_ref: (tmk, K), mel_ref: (K, n_out), out_ref: (tmk, n_out)
    mel_spec = jnp.dot(spec_ref[...], mel_ref[...], preferred_element_type=jnp.float32)
    if is_log:
        log_spec = (10.0 / np.log(10.0)) * jnp.log(jnp.maximum(mel_spec, amin)) - offset
        out_ref[...] = log_spec.astype(out_ref.dtype)
    else:
        out_ref[...] = mel_spec.astype(out_ref.dtype)


# ----------------------------------------------------------------------------
# Wrapper
# ----------------------------------------------------------------------------
def _round_up(x, m):
    return ((x + m - 1) // m) * m


def _lane_align_freq(x2d, melW_np):
    """Make the contraction axis a multiple of 128 lanes without changing the
    result: trim frequency bins whose melW row is all-zero (spectrum edges),
    otherwise zero-pad both operands."""
    F = melW_np.shape[0]
    if F % 128 == 0:
        return x2d, melW_np
    row_nz = np.any(melW_np != 0.0, axis=1)
    if row_nz.any():
        lo = int(np.argmax(row_nz))
        hi = int(F - np.argmax(row_nz[::-1]))
    else:
        lo, hi = 0, 1
    F_trim = _round_up(max(hi - lo, 1), 128)
    if F_trim <= F:
        start = min(lo, F - F_trim)
        return x2d[:, start:start + F_trim], melW_np[start:start + F_trim]
    F_padded = _round_up(F, 128)
    x2d = jnp.pad(x2d, ((0, 0), (0, F_padded - F)))
    melW_np = np.pad(melW_np, ((0, F_padded - F), (0, 0)))
    return x2d, melW_np


def logmel_filterbank(spectrogram, melW, *, ref=1.0, amin=1e-10, top_db=None,
                      is_log=True, tm=2048, input_dtype=jnp.float32,
                      vmem_limit_bytes=None):
    """spectrogram: (..., F) float; melW: concrete (F, n_mels) array.
    Returns (..., n_mels) float32 (log-)mel spectrogram, matching the PyTorch
    LogmelFilterBank.forward semantics (top_db unsupported).

    `input_dtype=jnp.bfloat16` halves HBM read traffic (slightly changes
    numerics before the log); default float32 matches the reference exactly.
    """
    if top_db is not None:
        # TODO(synk): top_db clipping needs a global max reduction over the full
        # output (second pass); module default is top_db=None.
        raise NotImplementedError("top_db is not supported in the Pallas kernel")

    orig_shape = spectrogram.shape
    F = int(orig_shape[-1])
    melW_np = np.asarray(melW, dtype=np.float32)
    assert melW_np.shape[0] == F, "melW first dim must match spectrogram last dim"
    n_mels = int(melW_np.shape[1])
    M = int(np.prod(orig_shape[:-1]))

    x2d = jnp.reshape(spectrogram, (M, F)).astype(jnp.float32)

    # Contraction axis: trim provably-zero mel rows / zero-pad so K % 128 == 0.
    x2d, melW_np = _lane_align_freq(x2d, melW_np)
    F_eff = melW_np.shape[0]

    # Lane-dense output: fold rows so the kernel's output last dim is >= 128.
    fold = 128 // n_mels if (n_mels < 128 and 128 % n_mels == 0) else 1
    n_out = fold * n_mels
    K = fold * F_eff

    # Row tiling: large tiles, shrunk for tiny inputs, with zero padding so M
    # need not divide the tile (replaces the old divisibility assert).
    align = 8 * fold
    tm = _round_up(max(min(tm, _round_up(M, align)), align), align)
    M_pad = _round_up(M, tm)
    if M_pad != M:
        x2d = jnp.pad(x2d, ((0, M_pad - M), (0, 0)))

    if fold > 1:
        x2d = x2d.reshape(M_pad // fold, K)
        mel_big = np.zeros((K, n_out), dtype=np.float32)
        for r in range(fold):
            mel_big[r * F_eff:(r + 1) * F_eff, r * n_mels:(r + 1) * n_mels] = melW_np
    else:
        mel_big = melW_np

    Mk, tmk = M_pad // fold, tm // fold

    x2d = x2d.astype(input_dtype)
    mel_big = jnp.asarray(mel_big, dtype=input_dtype)

    # power_to_db subtraction constant, folded at trace time (no SMEM operand).
    offset = float(10.0 * np.log10(np.maximum(amin, ref)))
    kernel = functools.partial(_logmel_kernel, amin=float(amin), offset=offset,
                               is_log=is_log)

    out2d = pl.pallas_call(
        kernel,
        out_shape=jax.ShapeDtypeStruct((Mk, n_out), jnp.float32),
        grid_spec=pltpu.PrefetchScalarGridSpec(
            num_scalar_prefetch=0,
            grid=(Mk // tmk,),
            in_specs=[
                pl.BlockSpec((tmk, K), lambda i: (i, 0)),      # spectrogram tile
                pl.BlockSpec((K, n_out), lambda i: (0, 0)),    # (block-diag) melW, VMEM resident
            ],
            out_specs=pl.BlockSpec((tmk, n_out), lambda i: (i, 0)),
        ),
        compiler_params=pltpu.CompilerParams(
            dimension_semantics=("parallel",),
            vmem_limit_bytes=vmem_limit_bytes),
    )(x2d, mel_big)

    out = out2d.reshape(M_pad, n_mels)[:M]
    return out.reshape(orig_shape[:-1] + (n_mels,))


# ----------------------------------------------------------------------------
# Reference (pure JAX) for correctness check
# ----------------------------------------------------------------------------
def logmel_ref(spectrogram, melW, *, ref=1.0, amin=1e-10, is_log=True):
    mel = jnp.matmul(spectrogram, melW)
    if not is_log:
        return mel
    log_spec = 10.0 * jnp.log10(jnp.clip(mel, amin, np.inf))
    log_spec = log_spec - 10.0 * np.log10(np.maximum(amin, ref))
    return log_spec


if __name__ == "__main__":
    sr, n_fft, n_mels, fmin, fmax = 8000, 256, 64, 50, 4000
    F = n_fft // 2 + 1  # 129

    melW = jnp.asarray(mel_filterbank(sr, n_fft, n_mels, fmin, fmax))  # (129, 64)

    key = jax.random.PRNGKey(0)
    k1, k2 = jax.random.split(key)

    # (batch, channels, time, freq) like the PANNs Spectrogram output.
    spec_a = jax.random.uniform(k1, (2, 1, 16, F), dtype=jnp.float32)
    out_a = jax.block_until_ready(logmel_filterbank(spec_a, melW))
    np.testing.assert_allclose(np.asarray(out_a), np.asarray(logmel_ref(spec_a, melW)),
                               rtol=1e-4, atol=1e-4)
    assert out_a.shape == (2, 1, 16, n_mels)

    # Row count not a multiple of the tile/fold -> exercises the padding path.
    spec_b = jax.random.uniform(k2, (2, 1, 50, F), dtype=jnp.float32)
    out_b = jax.block_until_ready(logmel_filterbank(spec_b, melW))
    np.testing.assert_allclose(np.asarray(out_b), np.asarray(logmel_ref(spec_b, melW)),
                               rtol=1e-4, atol=1e-4)
    assert out_b.shape == (2, 1, 50, n_mels)

    # is_log=False path (plain mel spectrogram).
    out_c = jax.block_until_ready(logmel_filterbank(spec_a, melW, is_log=False))
    np.testing.assert_allclose(np.asarray(out_c),
                               np.asarray(logmel_ref(spec_a, melW, is_log=False)),
                               rtol=1e-4, atol=1e-4)

    print("KERNEL_OK")
</pallas_src>

<mosaic_0001>
module attributes {stable_mosaic.version = 11 : i64} {
  func.func @_logmel_kernel(%arg0: i32, %arg1: memref<16x256xf32, #tpu.memory_space<vmem>>, %arg2: memref<256x128xf32, #tpu.memory_space<vmem>>, %arg3: memref<16x128xf32, #tpu.memory_space<vmem>>) attributes {dimension_semantics = [#tpu.dimension_semantics<parallel>], iteration_bounds = array<i64: 1>, scalar_prefetch = 0 : i64, scratch_operands = 0 : i64, tpu.core_type = #tpu.core_type<tc>, window_params = [{transform_indices = @transform_0, window_bounds = array<i64: 16, 256>}, {pipeline_mode = #tpu.pipeline_mode<synchronous>, transform_indices = @transform_1, window_bounds = array<i64: 256, 128>}, {transform_indices = @transform_2, window_bounds = array<i64: 16, 128>}]} {
    %c0 = arith.constant 0 : index
    %c0_0 = arith.constant 0 : index
    %0 = vector.load %arg1[%c0, %c0_0] : memref<16x256xf32, #tpu.memory_space<vmem>>, vector<16x256xf32>
    %c0_1 = arith.constant 0 : index
    %c0_2 = arith.constant 0 : index
    %1 = vector.load %arg2[%c0_1, %c0_2] : memref<256x128xf32, #tpu.memory_space<vmem>>, vector<256x128xf32>
    %cst = arith.constant dense<0.000000e+00> : vector<16x128xf32>
    %2 = tpu.matmul %0, %1, %cst {dimension_numbers = #tpu.dot_dimension_numbers<[1], [0], [0], [1], [0, 0, 1, 1], [], []>} : vector<16x256xf32>, vector<256x128xf32>, vector<16x128xf32> -> vector<16x128xf32>
    %cst_3 = arith.constant 1.000000e-10 : f32
    %3 = vector.broadcast %cst_3 : f32 to vector<16x128xf32>
    %4 = arith.maximumf %2, %3 : vector<16x128xf32>
    %5 = math.log %4 : vector<16x128xf32>
    %cst_4 = arith.constant 4.34294462 : f32
    %6 = vector.broadcast %cst_4 : f32 to vector<16x128xf32>
    %7 = arith.mulf %6, %5 : vector<16x128xf32>
    %cst_5 = arith.constant 0.000000e+00 : f32
    %8 = vector.broadcast %cst_5 : f32 to vector<16x128xf32>
    %9 = arith.subf %7, %8 : vector<16x128xf32>
    %c0_6 = arith.constant 0 : index
    %c0_7 = arith.constant 0 : index
    %10 = vector.load %arg3[%c0_6, %c0_7] : memref<16x128xf32, #tpu.memory_space<vmem>>, vector<16x128xf32>
    tpu.vector_store %arg3[%c0_6, %c0_7], %9 {strides = array<i32>} : memref<16x128xf32, #tpu.memory_space<vmem>>, vector<16x128xf32>,
    return
  }
  func.func @transform_0(%arg0: i32) -> (i32, i32) {
    %c0_i32 = arith.constant 0 : i32
    %c0_i32_0 = arith.constant 0 : i32
    return %arg0, %c0_i32 : i32, i32
  }
  func.func @transform_1(%arg0: i32) -> (i32, i32) {
    %c0_i32 = arith.constant 0 : i32
    %c0_i32_0 = arith.constant 0 : i32
    %c0_i32_1 = arith.constant 0 : i32
    return %c0_i32, %c0_i32_0 : i32, i32
  }
  func.func @transform_2(%arg0: i32) -> (i32, i32) {
    %c0_i32 = arith.constant 0 : i32
    %c0_i32_0 = arith.constant 0 : i32
    return %arg0, %c0_i32 : i32, i32
  }
}

</mosaic_0001>

<llo_original>
// kernel: tpu_custom_call.1
$region0: #{tpu_custom_call.1}
  #allocation0 [shape = 'u32[]', space=smem, size = 0x4, offset = 0x4, fixed_abs, tag = 'smem constant byte address 0x4 - core index']
  #allocation1 [shape = 'u32[144,128]{1,0:T(1,128)}', space=vmem, size = 0x12000, scoped, tag = 'internal scratch']
  %s0 = inlined_call_operand.hbm [shape: f32[16,256], index: 0, kind: input, shape index: {}]
  %s1 = inlined_call_operand.hbm [shape: f32[256,128], index: 1, kind: input, shape index: {}]
  %s2 = inlined_call_operand.hbm [shape: f32[16,128], index: 2, kind: output, shape index: {}]
  %s3 = sld [smem:[#allocation0]]
  $region26: #{tpu_custom_call.1} parent=0
    _
  %s5 = ssub.s32 1, %s3
  %s6 = scalar_select 0, %s5, %s3
  $region1: #{tpu_custom_call.1} parent=0
    #allocation2 [shape = 'u8[16384]{0}', space=vmem, size = 0x4000, scoped, tag = 'input window, operand 0, single buffered']
    #allocation3 [shape = 's32[1]{0}', space=sflag, size = 0x4, scoped, tag = 'scoped memory for tpu_custom_call.1']
    #allocation4 [shape = 's32[1]{0}', space=sflag, size = 0x4, scoped, tag = 'scoped memory for tpu_custom_call.1']
    #allocation5 [shape = 'u8[131072]{0}', space=vmem, size = 0x20000, scoped, tag = 'input window, operand 1, single buffered']
    #allocation6 [shape = 's32[1]{0}', space=sflag, size = 0x4, scoped, tag = 'scoped memory for tpu_custom_call.1']
    #allocation7 [shape = 'u8[8192]{0}', space=vmem, size = 0x2000, scoped, tag = 'output window, operand 0, single buffered']
    %7 = vsyncpa [#allocation3], 0
    %8 = vsyncpa [#allocation6], 0
    %9 = vsyncpa [#allocation4], 0
    // Predicated region
    $region2: #{tpu_custom_call.1} parent=1 // pred_check
      _
    $region3: #{tpu_custom_call.1} parent=1 // pred_check_branch
      %11 = sbr.rel (0) target = $region5
    $region4: #{tpu_custom_call.1} parent=1 // pred_region
      %s13 = ssub.s32 512, 512
      %14 = vsyncadd [#allocation3], %s13
      %s15 = sshll.u32 [#allocation2], 4
      %s16 = int_to_ptr.vmem [resolvable:$true] %s15
      %21 = dma.hbm_to_vmem [thread:$0]  %s0, 512, %s16, [#allocation3], 256, 256, 16
    $region5: #{tpu_custom_call.1} parent=1 // pred_fallthru
      _
    // Predicated region
    $region6: #{tpu_custom_call.1} parent=1 // pred_check
      _
    $region7: #{tpu_custom_call.1} parent=1 // pred_check_branch
      %23 = sbr.rel (0) target = $region9
    $region8: #{tpu_custom_call.1} parent=1 // pred_region
      %s25 = ssub.s32 4096, 4096
      %26 = vsyncadd [#allocation6], %s25
      %s27 = sshll.u32 [#allocation5], 4
      %s28 = int_to_ptr.vmem [resolvable:$true] %s27
      %33 = dma.hbm_to_vmem [thread:$0]  %s1, 4096, %s28, [#allocation6], 128, 128, 8
    $region9: #{tpu_custom_call.1} parent=1 // pred_fallthru
      _
    // Predicated region
    $region10: #{tpu_custom_call.1} parent=1 // pred_check
      _
    $region11: #{tpu_custom_call.1} parent=1 // pred_check_branch
      %35 = sbr.rel (0) target = $region13
    $region12: #{tpu_custom_call.1} parent=1 // pred_region
      %36 = dma.done [#allocation3], 512
    $region13: #{tpu_custom_call.1} parent=1 // pred_fallthru
      _
    // Predicated region
    $region14: #{tpu_custom_call.1} parent=1 // pred_check
      _
    $region15: #{tpu_custom_call.1} parent=1 // pred_check_branch
      %38 = sbr.rel (0) target = $region17
    $region16: #{tpu_custom_call.1} parent=1 // pred_region
      %39 = dma.done [#allocation6], 4096
    $region17: #{tpu_custom_call.1} parent=1 // pred_fallthru
      _
    %v40 = vld [vmem:[#allocation2] sm:$0xff]
    %v41 = vld [vmem:[#allocation2 + $0x8] sm:$0xff]
    %v42 = vld [vmem:[#allocation2 + $0x10] sm:$0xff]
    %v43 = vld [vmem:[#allocation2 + $0x18] sm:$0xff]
    %v44 = vld [vmem:[#allocation5] sm:$0xff]
    %v45 = vld [vmem:[#allocation5 + $0x8] sm:$0xff]
    %v46 = vld [vmem:[#allocation5 + $0x10] sm:$0xff]
    %v47 = vld [vmem:[#allocation5 + $0x18] sm:$0xff]
    %v48 = vld [vmem:[#allocation5 + $0x20] sm:$0xff]
    %v49 = vld [vmem:[#allocation5 + $0x28] sm:$0xff]
    %v50 = vld [vmem:[#allocation5 + $0x30] sm:$0xff]
    %v51 = vld [vmem:[#allocation5 + $0x38] sm:$0xff]
    %v52 = vld [vmem:[#allocation5 + $0x40] sm:$0xff]
    %v53 = vld [vmem:[#allocation5 + $0x48] sm:$0xff]
    %v54 = vld [vmem:[#allocation5 + $0x50] sm:$0xff]
    %v55 = vld [vmem:[#allocation5 + $0x58] sm:$0xff]
    %v56 = vld [vmem:[#allocation5 + $0x60] sm:$0xff]
    %v57 = vld [vmem:[#allocation5 + $0x68] sm:$0xff]
    %v58 = vld [vmem:[#allocation5 + $0x70] sm:$0xff]
    %v59 = vld [vmem:[#allocation5 + $0x78] sm:$0xff]
    %v60 = vld [vmem:[#allocation5 + $0x80] sm:$0xff]
    %v61 = vld [vmem:[#allocation5 + $0x88] sm:$0xff]
    %v62 = vld [vmem:[#allocation5 + $0x90] sm:$0xff]
    %v63 = vld [vmem:[#allocation5 + $0x98] sm:$0xff]
    %v64 = vld [vmem:[#allocation5 + $0xa0] sm:$0xff]
    %v65 = vld [vmem:[#allocation5 + $0xa8] sm:$0xff]
    %v66 = vld [vmem:[#allocation5 + $0xb0] sm:$0xff]
    %v67 = vld [vmem:[#allocation5 + $0xb8] sm:$0xff]
    %v68 = vld [vmem:[#allocation5 + $0xc0] sm:$0xff]
    %v69 = vld [vmem:[#allocation5 + $0xc8] sm:$0xff]
    %v70 = vld [vmem:[#allocation5 + $0xd0] sm:$0xff]
    %v71 = vld [vmem:[#allocation5 + $0xd8] sm:$0xff]
    %v72 = vld [vmem:[#allocation5 + $0xe0] sm:$0xff]
    %v73 = vld [vmem:[#allocation5 + $0xe8] sm:$0xff]
    %v74 = vld [vmem:[#allocation5 + $0xf0] sm:$0xff]
    %v75 = vld [vmem:[#allocation5 + $0xf8] sm:$0xff]
    %76 = vmatprep.subr.mxu0 0.0
    %77 = vmatpush1.msra.mxu0 %v44
    %78 = vmatprep.subr.mxu0 0.0
    %79 = vmatpush1.msra.mxu0 %v45
    %80 = vmatprep.subr.mxu0 0.0
    %81 = vmatpush1.msra.mxu0 %v46
    %82 = vmatprep.subr.mxu0 0.0
    %83 = vmatpush1.msra.mxu0 %v47
    %84 = vmatprep.subr.mxu0 0.0
    %85 = vmatpush1.msra.mxu0 %v48
    %86 = vmatprep.subr.mxu0 0.0
    %87 = vmatpush1.msra.mxu0 %v49
    %88 = vmatprep.subr.mxu0 0.0
    %89 = vmatpush1.msra.mxu0 %v50
    %90 = vmatprep.subr.mxu0 0.0
    %91 = vmatpush1.msra.mxu0 %v51
    %92 = vmatprep.subr.mxu0 0.0
    %93 = vmatpush1.msra.mxu0 %v52
    %94 = vmatprep.subr.mxu0 0.0
    %95 = vmatpush1.msra.mxu0 %v53
    %96 = vmatprep.subr.mxu0 0.0
    %97 = vmatpush1.msra.mxu0 %v54
    %98 = vmatprep.subr.mxu0 0.0
    %99 = vmatpush1.msra.mxu0 %v55
    %100 = vmatprep.subr.mxu0 0.0
    %101 = vmatpush1.msra.mxu0 %v56
    %102 = vmatprep.subr.mxu0 0.0
    %103 = vmatpush1.msra.mxu0 %v57
    %104 = vmatprep.subr.mxu0 0.0
    %105 = vmatpush1.msra.mxu0 %v58
    %106 = vmatprep.subr.mxu0 0.0
    %107 = vmatpush1.msra.mxu0 %v59
    %108 = vmatprep.subr.mxu0 0.0
    %109 = vmatpush1.msra.mxu0 %v60
    %110 = vmatprep.subr.mxu0 0.0
    %111 = vmatpush1.msra.mxu0 %v61
    %112 = vmatprep.subr.mxu0 0.0
    %113 = vmatpush1.msra.mxu0 %v62
    %114 = vmatprep.subr.mxu0 0.0
    %115 = vmatpush1.msra.mxu0 %v63
    %116 = vmatprep.subr.mxu0 0.0
    %117 = vmatpush1.msra.mxu0 %v64
    %118 = vmatprep.subr.mxu0 0.0
    %119 = vmatpush1.msra.mxu0 %v65
    %120 = vmatprep.subr.mxu0 0.0
    %121 = vmatpush1.msra.mxu0 %v66
    %122 = vmatprep.subr.mxu0 0.0
    %123 = vmatpush1.msra.mxu0 %v67
    %124 = vmatprep.subr.mxu0 0.0
    %125 = vmatpush1.msra.mxu0 %v68
    %126 = vmatprep.subr.mxu0 0.0
    %127 = vmatpush1.msra.mxu0 %v69
    %128 = vmatprep.subr.mxu0 0.0
    %129 = vmatpush1.msra.mxu0 %v70
    %130 = vmatprep.subr.mxu0 0.0
    %131 = vmatpush1.msra.mxu0 %v71
    %132 = vmatprep.subr.mxu0 0.0
    %133 = vmatpush1.msra.mxu0 %v72
    %134 = vmatprep.subr.mxu0 0.0
    %135 = vmatpush1.msra.mxu0 %v73
    %136 = vmatprep.subr.mxu0 0.0
    %137 = vmatpush1.msra.mxu0 %v74
    %138 = vmatprep.subr.mxu0 0.0
    %139 = vmatpush1.msra.mxu0 %v75
    %140 = vmatprep.mubr.f32.mxu0 %v41
    %141 = vmatmul.mubr.f32.gmra.mrb[0].mxu0 %v40
    %v142 = vpop.f32.mrb[0].mxu0
    %v143 = vadd.f32 0.0, %v142
    %v144 = vpop.f32.mrb[0].mxu0
    %145 = vmatprep.mubr.f32.mxu0 %v43
    %146 = vmatmul.mubr.f32.gmra.mrb[0].mxu0 %v42
    %v147 = vpop.f32.mrb[0].mxu0
    %v148 = vadd.f32 0.0, %v147
    %v149 = vpop.f32.mrb[0].mxu0
    %150 = vdwg.mxu0
    %v151 = vmax.f32 %v143, 1e-10
    %v152 = vmax.f32 %v148, 1e-10
    %v153 = vlog2.pop %v151
    %v154 = vmul.f32 %v153, 0.6931472
    %v155 = vlog2.pop %v152
    %v156 = vmul.f32 %v155, 0.6931472
    %v157 = vmul.f32 %v154, 4.3429446
    %v158 = vmul.f32 %v156, 4.3429446
    %159 = vst [vmem:[#allocation7] sm:$0xff] %v157
    %160 = vst [vmem:[#allocation7 + $0x8] sm:$0xff] %v158
    // Predicated region
    $region18: #{tpu_custom_call.1} parent=1 // pred_check
      _
    $region19: #{tpu_custom_call.1} parent=1 // pred_check_branch
      %162 = sbr.rel (0) target = $region21
    $region20: #{tpu_custom_call.1} parent=1 // pred_region
      %s164 = ssub.s32 256, 256
      %165 = vsyncadd [#allocation4], %s164
      %s166 = sshll.u32 [#allocation7], 4
      %s167 = int_to_ptr.vmem [resolvable:$true] %s166
      %172 = dma.vmem_to_hbm [thread:$0]  %s167, 256, %s2, [#allocation4], 128, 128, 8
    $region21: #{tpu_custom_call.1} parent=1 // pred_fallthru
      _
    // Predicated region
    $region22: #{tpu_custom_call.1} parent=1 // pred_check
      _
    $region23: #{tpu_custom_call.1} parent=1 // pred_check_branch
      %174 = sbr.rel (0) target = $region25
    $region24: #{tpu_custom_call.1} parent=1 // pred_region
      %175 = dma.done [#allocation4], 256
    $region25: #{tpu_custom_call.1} parent=1 // pred_fallthru
      _
    %176 = vsyncpa [#allocation3], 1
    %177 = vsyncpa [#allocation6], 1
    %178 = vsyncpa [#allocation4], 1

</llo_original>
